<compile_context>
chip_gen: v5e
topology: v5e:2x2
jax: 0.10.0
libtpu: 0.0.40
codegen_flags: <defaults>
</compile_context>

<pallas_src>
import jax
import jax.numpy as jnp
from jax.experimental import pallas as pl
from jax.experimental.pallas import tpu as pltpu


def _round_up(x, m):
    return (x + m - 1) // m * m


def _maybe_cast(a, dtype):
    return a if a.dtype == jnp.dtype(dtype) else a.astype(dtype)


def _maybe_pad(a, pads):
    if all(lo == 0 and hi == 0 for lo, hi in pads):
        return a
    return jnp.pad(a, pads)


def _tpu_gen_and_vmem():
    """Best-effort TPU generation + physical VMEM bytes (per TensorCore)."""
    kind = ""
    try:
        kind = jax.devices()[0].device_kind.lower()
    except Exception:
        pass
    if "v7" in kind:
        gen, default_vmem = "v7x", 64 << 20
    elif "v6" in kind:
        gen, default_vmem = "v6e", 128 << 20
    elif "v5" in kind:
        gen, default_vmem = "v5e", 128 << 20
    else:
        gen, default_vmem = "unknown", 64 << 20
    vmem = default_vmem
    try:
        vmem = int(pltpu.get_tpu_info().vmem_capacity_bytes)
    except Exception:
        pass
    return gen, vmem


def _ffn_kernel(x_ref, w1_ref, b1_ref, w2_ref, b2_ref, o_ref, acc_ref):
    # x_ref : (tm, Dp)   compute dtype      w1_ref: (Dp, tf)  compute dtype
    # b1_ref: (1, tf)    f32                w2_ref: (tf, Dp)  compute dtype
    # b2_ref: (1, Dp)    f32                o_ref : (tm, Dp)  output dtype
    # acc_ref: (tm, Dp)  f32 accumulator, persistent across the reduction axis
    k = pl.program_id(1)

    # Slice of the hidden activation: h[:, k*tf:(k+1)*tf] = relu(x @ w1_k + b1_k)
    h = jnp.dot(x_ref[...], w1_ref[...], preferred_element_type=jnp.float32)
    h = jnp.maximum(h + b1_ref[...], 0.0)  # bias + ReLU in f32 (v5e-safe)
    # dropout == identity (eval mode)

    # Contract the slice straight into the f32 accumulator (second matmul).
    contrib = jnp.dot(h.astype(w2_ref.dtype), w2_ref[...],
                      preferred_element_type=jnp.float32)

    @pl.when(k == 0)
    def _():                       # first step writes directly: no zero-init RMW
        acc_ref[...] = contrib

    @pl.when(k > 0)
    def _():
        acc_ref[...] += contrib

    @pl.when(k == pl.num_programs(1) - 1)
    def _():
        o_ref[...] = (acc_ref[...] + b2_ref[...]).astype(o_ref.dtype)


def positionwise_feed_forward(x, w1, b1, w2, b2, *, tm=None, tf=None,
                              compute_dtype=None):
    """x: [batch, seq, d_model];  w1: [d_model, d_ff]; b1: [d_ff];
       w2: [d_ff, d_model]; b2: [d_model].  Weights are stored (in, out),
       i.e. the transpose of PyTorch nn.Linear's (out, in)."""
    batch, seq, d_model = x.shape
    d_ff = w1.shape[1]
    out_dtype = x.dtype
    if compute_dtype is None:
        # bf16 matmuls (f32 accumulation) are the fast path on v5e/v6e/v7x;
        # full-f32 compute is opt-in.
        compute_dtype = jnp.bfloat16 if x.dtype == jnp.float32 else x.dtype
    cbytes = jnp.dtype(compute_dtype).itemsize
    obytes = jnp.dtype(out_dtype).itemsize

    M = batch * seq
    gen, vmem_phys = _tpu_gen_and_vmem()

    # ---- tile selection --------------------------------------------------
    # tm sets FLOPs per streamed weight byte (~2*tm/cbytes).  Crossover points:
    # v6e ~655 FLOP/B -> tm >= ~672 (bf16); v7x ~310 -> >= ~320; v5e ~240.
    if tm is None:
        tm = {"v7x": 512, "v6e": 1024, "v5e": 512}.get(gen, 512)
    if tf is None:
        tf = 512 if gen == "v7x" else (1024 if d_ff >= 1024 else 512)

    # VMEM budget: ~80% of physical; extra headroom on 64 MiB (v7x) parts so
    # the compiler keeps room for internal scratch.
    vmem_cap = int(0.8 * vmem_phys)
    if vmem_phys <= 64 * 1024 * 1024:
        vmem_cap = min(vmem_cap, 52 * 1024 * 1024)

    # Cap tiles to the (padded) problem; keep sublane/lane alignment.
    tm = max(16, min(tm, _round_up(M, 16)))
    tm = _round_up(tm, 16)              # multiple of 16: ok for both f32 and bf16
    tf = max(128, min(tf, _round_up(d_ff, 128)))
    tf = _round_up(tf, 128)

    Dp = _round_up(d_model, 128)        # lane-dense last dim everywhere

    def footprint(tm_, tf_):
        return (2 * tm_ * Dp * cbytes          # x tile (double-buffered)
                + 2 * Dp * tf_ * cbytes        # w1 slice
                + 2 * 8 * tf_ * 4              # b1 (sublane-padded)
                + 2 * tf_ * Dp * cbytes        # w2 slice
                + 2 * 8 * Dp * 4               # b2
                + 2 * tm_ * Dp * obytes        # out tile
                + tm_ * Dp * 4                 # f32 accumulator
                + tm_ * tf_ * (4 + cbytes))    # materialized h + cast copy

    # Shrink tiles only if the working set exceeds the VMEM budget.
    while footprint(tm, tf) > vmem_cap and tm > 256:
        tm = _round_up(tm // 2, 16)
    while footprint(tm, tf) > vmem_cap and tf > 128:
        tf = _round_up(tf // 2, 128)
    while footprint(tm, tf) > vmem_cap and tm > 16:
        tm = _round_up(tm // 2, 16)

    # v7x has 2 TensorCores: keep >= 2 tiles on the "parallel" M axis whenever
    # M is big enough that each half still stays compute-bound.
    if gen == "v7x" and _round_up(M, tm) // tm < 2 and M >= 640:
        tm = _round_up((M + 1) // 2, 16)

    Mp = _round_up(M, tm)
    Fp = _round_up(d_ff, tf)

    # Zero-padding is exact: padded w1 rows / w2 rows+cols / bias entries are 0,
    # so they contribute nothing to real outputs; padded output rows/cols are
    # sliced off below.  Pads/casts are skipped when already aligned/typed.
    x2 = _maybe_cast(x.reshape(M, d_model), compute_dtype)
    x2 = _maybe_pad(x2, ((0, Mp - M), (0, Dp - d_model)))
    w1p = _maybe_pad(_maybe_cast(w1, compute_dtype),
                     ((0, Dp - d_model), (0, Fp - d_ff)))
    w2p = _maybe_pad(_maybe_cast(w2, compute_dtype),
                     ((0, Fp - d_ff), (0, Dp - d_model)))
    b1p = _maybe_pad(_maybe_cast(b1, jnp.float32),
                     ((0, Fp - d_ff),)).reshape(1, Fp)
    b2p = _maybe_pad(_maybe_cast(b2, jnp.float32),
                     ((0, Dp - d_model),)).reshape(1, Dp)

    grid = (Mp // tm, Fp // tf)
    n_m_tiles = grid[0]

    vmem_limit = int(min(vmem_cap,
                         max(32 * 1024 * 1024, int(1.2 * footprint(tm, tf)))))

    cost = pl.CostEstimate(
        flops=4 * Mp * Dp * Fp,                       # two matmuls
        transcendentals=0,
        bytes_accessed=int(Mp * Dp * cbytes           # x read once
                           + n_m_tiles * (2 * Dp * Fp * cbytes   # w1+w2 per M tile
                                          + Fp * 4 + Dp * 4)     # biases
                           + Mp * Dp * obytes))       # output written once

    out = pl.pallas_call(
        _ffn_kernel,
        out_shape=jax.ShapeDtypeStruct((Mp, Dp), out_dtype),
        grid_spec=pltpu.PrefetchScalarGridSpec(
            num_scalar_prefetch=0,
            grid=grid,
            in_specs=[
                pl.BlockSpec((tm, Dp), lambda i, k: (i, 0)),   # x row tile
                pl.BlockSpec((Dp, tf), lambda i, k: (0, k)),   # w1 slice
                pl.BlockSpec((1, tf), lambda i, k: (0, k)),    # b1 slice
                pl.BlockSpec((tf, Dp), lambda i, k: (k, 0)),   # w2 slice
                pl.BlockSpec((1, Dp), lambda i, k: (0, 0)),    # b2
            ],
            out_specs=pl.BlockSpec((tm, Dp), lambda i, k: (i, 0)),
            scratch_shapes=[pltpu.VMEM((tm, Dp), jnp.float32)],
        ),
        compiler_params=pltpu.CompilerParams(
            dimension_semantics=("parallel", "arbitrary"),
            vmem_limit_bytes=vmem_limit),
        cost_estimate=cost,
    )(x2, w1p, b1p, w2p, b2p)

    if Mp == M and Dp == d_model:
        return out.reshape(batch, seq, d_model)
    return out[:M, :d_model].reshape(batch, seq, d_model)


def _init_linear(key, fan_in, fan_out, dtype=jnp.float32):
    # Mimic torch.nn.Linear default init: U(-1/sqrt(fan_in), 1/sqrt(fan_in)).
    kw, kb = jax.random.split(key)
    bound = 1.0 / (fan_in ** 0.5)
    # Stored as (fan_in, fan_out) == transpose of PyTorch's (out, in).
    w = jax.random.uniform(kw, (fan_in, fan_out), dtype, -bound, bound)
    b = jax.random.uniform(kb, (fan_out,), dtype, -bound, bound)
    return w, b


if __name__ == "__main__":
    key = jax.random.PRNGKey(0)
    k_x, k_w1, k_w2, k_x2, k_w3, k_w4 = jax.random.split(key, 6)

    # --- small shape consistent with the module -------------------------------
    batch, seq, d_model, d_ff = 2, 8, 32, 64
    x = jax.random.normal(k_x, (batch, seq, d_model), jnp.float32)
    w1, b1 = _init_linear(k_w1, d_model, d_ff)
    w2, b2 = _init_linear(k_w2, d_ff, d_model)

    # Pure-JAX reference (eval-mode dropout == identity).
    y_ref = jnp.maximum(x @ w1 + b1, 0.0) @ w2 + b2

    # Default path: bf16 matmuls with f32 accumulation.
    y_bf = jax.block_until_ready(positionwise_feed_forward(x, w1, b1, w2, b2))
    assert y_bf.shape == (batch, seq, d_model)
    assert jnp.allclose(y_bf.astype(jnp.float32), y_ref, atol=5e-2, rtol=5e-2)

    # Opt-in f32 compute path: tight tolerance.
    y_f32 = jax.block_until_ready(
        positionwise_feed_forward(x, w1, b1, w2, b2, compute_dtype=jnp.float32))
    assert y_f32.shape == (batch, seq, d_model)
    assert jnp.allclose(y_f32, y_ref, atol=1e-4, rtol=1e-4)

    # --- multi-tile grid: 2 M tiles x 4 reduction steps ------------------------
    batch2, seq2, dm2, df2 = 2, 64, 128, 512
    x_b = jax.random.normal(k_x2, (batch2, seq2, dm2), jnp.float32)
    w1b, b1b = _init_linear(k_w3, dm2, df2)
    w2b, b2b = _init_linear(k_w4, df2, dm2)
    y2_ref = jnp.maximum(x_b @ w1b + b1b, 0.0) @ w2b + b2b
    y2 = jax.block_until_ready(
        positionwise_feed_forward(x_b, w1b, b1b, w2b, b2b,
                                  tm=64, tf=128, compute_dtype=jnp.float32))
    assert y2.shape == (batch2, seq2, dm2)
    assert jnp.allclose(y2, y2_ref, atol=1e-3, rtol=1e-3)

    print("KERNEL_OK")
</pallas_src>

<mosaic_0001>
module attributes {stable_mosaic.version = 11 : i64} {
  func.func @_ffn_kernel(%arg0: i32, %arg1: i32, %arg2: memref<16x128xbf16, #tpu.memory_space<vmem>>, %arg3: memref<128x128xbf16, #tpu.memory_space<vmem>>, %arg4: memref<1x128xf32, #tpu.memory_space<vmem>>, %arg5: memref<128x128xbf16, #tpu.memory_space<vmem>>, %arg6: memref<1x128xf32, #tpu.memory_space<vmem>>, %arg7: memref<16x128xf32, #tpu.memory_space<vmem>>, %arg8: memref<16x128xf32, #tpu.memory_space<vmem>>) attributes {dimension_semantics = [#tpu.dimension_semantics<parallel>, #tpu.dimension_semantics<arbitrary>], iteration_bounds = array<i64: 1, 1>, scalar_prefetch = 0 : i64, scratch_operands = 1 : i64, tpu.core_type = #tpu.core_type<tc>, window_params = [{transform_indices = @transform_0, window_bounds = array<i64: 16, 128>}, {transform_indices = @transform_1, window_bounds = array<i64: 128, 128>}, {transform_indices = @transform_2, window_bounds = array<i64: 1, 128>}, {transform_indices = @transform_3, window_bounds = array<i64: 128, 128>}, {pipeline_mode = #tpu.pipeline_mode<synchronous>, transform_indices = @transform_4, window_bounds = array<i64: 1, 128>}, {transform_indices = @transform_5, window_bounds = array<i64: 16, 128>}]} {
    %c0 = arith.constant 0 : index
    %c0_0 = arith.constant 0 : index
    %0 = vector.load %arg2[%c0, %c0_0] : memref<16x128xbf16, #tpu.memory_space<vmem>>, vector<16x128xbf16>
    %c0_1 = arith.constant 0 : index
    %c0_2 = arith.constant 0 : index
    %1 = vector.load %arg3[%c0_1, %c0_2] : memref<128x128xbf16, #tpu.memory_space<vmem>>, vector<128x128xbf16>
    %cst = arith.constant dense<0.000000e+00> : vector<16x128xf32>
    %2 = tpu.matmul %0, %1, %cst {dimension_numbers = #tpu.dot_dimension_numbers<[1], [0], [0], [1], [0, 0, 1, 1], [], []>} : vector<16x128xbf16>, vector<128x128xbf16>, vector<16x128xf32> -> vector<16x128xf32>
    %c0_3 = arith.constant 0 : index
    %c0_4 = arith.constant 0 : index
    %3 = vector.load %arg4[%c0_3, %c0_4] : memref<1x128xf32, #tpu.memory_space<vmem>>, vector<1x128xf32>
    %4 = vector.broadcast %3 : vector<1x128xf32> to vector<16x128xf32>
    %5 = arith.addf %2, %4 : vector<16x128xf32>
    %cst_5 = arith.constant 0.000000e+00 : f32
    %6 = vector.broadcast %cst_5 : f32 to vector<16x128xf32>
    %7 = arith.maximumf %5, %6 : vector<16x128xf32>
    %8 = arith.truncf %7 : vector<16x128xf32> to vector<16x128xbf16>
    %c0_6 = arith.constant 0 : index
    %c0_7 = arith.constant 0 : index
    %9 = vector.load %arg5[%c0_6, %c0_7] : memref<128x128xbf16, #tpu.memory_space<vmem>>, vector<128x128xbf16>
    %cst_8 = arith.constant dense<0.000000e+00> : vector<16x128xf32>
    %10 = tpu.matmul %8, %9, %cst_8 {dimension_numbers = #tpu.dot_dimension_numbers<[1], [0], [0], [1], [0, 0, 1, 1], [], []>} : vector<16x128xbf16>, vector<128x128xbf16>, vector<16x128xf32> -> vector<16x128xf32>
    %c0_i32 = arith.constant 0 : i32
    %11 = arith.cmpi eq, %arg1, %c0_i32 : i32
    %12 = arith.extui %11 : i1 to i32
    %c0_i32_9 = arith.constant 0 : i32
    %13 = arith.cmpi ne, %12, %c0_i32_9 : i32
    scf.if %13 {
      %c0_14 = arith.constant 0 : index
      %c0_15 = arith.constant 0 : index
      %20 = vector.load %arg8[%c0_14, %c0_15] : memref<16x128xf32, #tpu.memory_space<vmem>>, vector<16x128xf32>
      tpu.vector_store %arg8[%c0_14, %c0_15], %10 {strides = array<i32>} : memref<16x128xf32, #tpu.memory_space<vmem>>, vector<16x128xf32>,
    } else {
    }
    %c0_i32_10 = arith.constant 0 : i32
    %14 = arith.cmpi sgt, %arg1, %c0_i32_10 : i32
    %15 = arith.extui %14 : i1 to i32
    %c0_i32_11 = arith.constant 0 : i32
    %16 = arith.cmpi ne, %15, %c0_i32_11 : i32
    scf.if %16 {
      %c0_14 = arith.constant 0 : index
      %c0_15 = arith.constant 0 : index
      %20 = vector.load %arg8[%c0_14, %c0_15] : memref<16x128xf32, #tpu.memory_space<vmem>>, vector<16x128xf32>
      %21 = arith.addf %20, %10 : vector<16x128xf32>
      %c0_16 = arith.constant 0 : index
      %c0_17 = arith.constant 0 : index
      %22 = vector.load %arg8[%c0_16, %c0_17] : memref<16x128xf32, #tpu.memory_space<vmem>>, vector<16x128xf32>
      tpu.vector_store %arg8[%c0_16, %c0_17], %21 {strides = array<i32>} : memref<16x128xf32, #tpu.memory_space<vmem>>, vector<16x128xf32>,
    } else {
    }
    %c0_i32_12 = arith.constant 0 : i32
    %17 = arith.cmpi eq, %arg1, %c0_i32_12 : i32
    %18 = arith.extui %17 : i1 to i32
    %c0_i32_13 = arith.constant 0 : i32
    %19 = arith.cmpi ne, %18, %c0_i32_13 : i32
    scf.if %19 {
      %c0_14 = arith.constant 0 : index
      %c0_15 = arith.constant 0 : index
      %20 = vector.load %arg8[%c0_14, %c0_15] : memref<16x128xf32, #tpu.memory_space<vmem>>, vector<16x128xf32>
      %c0_16 = arith.constant 0 : index
      %c0_17 = arith.constant 0 : index
      %21 = vector.load %arg6[%c0_16, %c0_17] : memref<1x128xf32, #tpu.memory_space<vmem>>, vector<1x128xf32>
      %22 = vector.broadcast %21 : vector<1x128xf32> to vector<16x128xf32>
      %23 = arith.addf %20, %22 : vector<16x128xf32>
      %c0_18 = arith.constant 0 : index
      %c0_19 = arith.constant 0 : index
      %24 = vector.load %arg7[%c0_18, %c0_19] : memref<16x128xf32, #tpu.memory_space<vmem>>, vector<16x128xf32>
      tpu.vector_store %arg7[%c0_18, %c0_19], %23 {strides = array<i32>} : memref<16x128xf32, #tpu.memory_space<vmem>>, vector<16x128xf32>,
    } else {
    }
    return
  }
  func.func @transform_0(%arg0: i32, %arg1: i32) -> (i32, i32) {
    %c0_i32 = arith.constant 0 : i32
    %c0_i32_0 = arith.constant 0 : i32
    return %arg0, %c0_i32 : i32, i32
  }
  func.func @transform_1(%arg0: i32, %arg1: i32) -> (i32, i32) {
    %c0_i32 = arith.constant 0 : i32
    %c0_i32_0 = arith.constant 0 : i32
    return %c0_i32, %arg1 : i32, i32
  }
  func.func @transform_2(%arg0: i32, %arg1: i32) -> (i32, i32) {
    %c0_i32 = arith.constant 0 : i32
    %c0_i32_0 = arith.constant 0 : i32
    return %c0_i32, %arg1 : i32, i32
  }
  func.func @transform_3(%arg0: i32, %arg1: i32) -> (i32, i32) {
    %c0_i32 = arith.constant 0 : i32
    %c0_i32_0 = arith.constant 0 : i32
    return %arg1, %c0_i32 : i32, i32
  }
  func.func @transform_4(%arg0: i32, %arg1: i32) -> (i32, i32) {
    %c0_i32 = arith.constant 0 : i32
    %c0_i32_0 = arith.constant 0 : i32
    %c0_i32_1 = arith.constant 0 : i32
    return %c0_i32, %c0_i32_0 : i32, i32
  }
  func.func @transform_5(%arg0: i32, %arg1: i32) -> (i32, i32) {
    %c0_i32 = arith.constant 0 : i32
    %c0_i32_0 = arith.constant 0 : i32
    return %arg0, %c0_i32 : i32, i32
  }
}

</mosaic_0001>

<llo_original>
// kernel: tpu_custom_call.1
$region0: #{tpu_custom_call.1}
  #allocation0 [shape = 'u32[]', space=smem, size = 0x4, offset = 0x4, fixed_abs, tag = 'smem constant byte address 0x4 - core index']
  #allocation1 [shape = 'u32[72,128]{1,0:T(1,128)}', space=vmem, size = 0x9000, scoped, tag = 'internal scratch']
  #allocation2 [shape = 'f32[16,128]{1,0:T(8,128)}', space=vmem, size = 0x2000, scoped, tag = 'scratch operand']
  %s0 = inlined_call_operand.hbm [shape: bf16[16,128], index: 0, kind: input, shape index: {}]
  %s1 = inlined_call_operand.hbm [shape: bf16[128,128], index: 1, kind: input, shape index: {}]
  %s2 = inlined_call_operand.vmem [shape: f32[1,128], index: 2, kind: input, shape index: {}]
  %s3 = inlined_call_operand.hbm [shape: bf16[128,128], index: 3, kind: input, shape index: {}]
  %s4 = inlined_call_operand.vmem [shape: f32[1,128], index: 4, kind: input, shape index: {}]
  %s5 = inlined_call_operand.hbm [shape: f32[16,128], index: 5, kind: output, shape index: {}]
  %s6 = sld [smem:[#allocation0]]
  $region54: #{tpu_custom_call.1} parent=0
    _
  %s8 = ssub.s32 1, %s6
  %s9 = scalar_select 0, %s8, %s6
  $region1: #{tpu_custom_call.1} parent=0
    #allocation3 [shape = 'u8[4096]{0}', space=vmem, size = 0x1000, scoped, tag = 'input window, operand 0, single buffered']
    #allocation4 [shape = 's32[1]{0}', space=sflag, size = 0x4, scoped, tag = 'scoped memory for tpu_custom_call.1']
    #allocation5 [shape = 's32[1]{0}', space=sflag, size = 0x4, scoped, tag = 'scoped memory for tpu_custom_call.1']
    #allocation6 [shape = 'u8[32768]{0}', space=vmem, size = 0x8000, scoped, tag = 'input window, operand 1, single buffered']
    #allocation7 [shape = 's32[1]{0}', space=sflag, size = 0x4, scoped, tag = 'scoped memory for tpu_custom_call.1']
    #allocation8 [shape = 'u8[32768]{0}', space=vmem, size = 0x8000, scoped, tag = 'input window, operand 3, single buffered']
    #allocation9 [shape = 'u8[8192]{0}', space=vmem, size = 0x2000, scoped, tag = 'output window, operand 0, single buffered']
    %10 = vsyncpa [#allocation4], 0
    %11 = vsyncpa [#allocation7], 0
    %12 = vsyncpa [#allocation5], 0
    // Predicated region
    $region2: #{tpu_custom_call.1} parent=1 // pred_check
      _
    $region3: #{tpu_custom_call.1} parent=1 // pred_check_branch
      %14 = sbr.rel (0) target = $region5
    $region4: #{tpu_custom_call.1} parent=1 // pred_region
      %16 = vsyncadd [#allocation4], 0
      %s17 = sshll.u32 %s0, 4
      %s18 = int_to_ptr.hbm [resolvable:$true] %s17
      %s19 = sshll.u32 [#allocation3], 4
      %s20 = int_to_ptr.vmem [resolvable:$true] %s19
      %25 = dma.hbm_to_vmem [thread:$0]  %s18, 128, %s20, [#allocation4], 64, 64, 4
    $region5: #{tpu_custom_call.1} parent=1 // pred_fallthru
      _
    // Predicated region
    $region6: #{tpu_custom_call.1} parent=1 // pred_check
      _
    $region7: #{tpu_custom_call.1} parent=1 // pred_check_branch
      %27 = sbr.rel (0) target = $region9
    $region8: #{tpu_custom_call.1} parent=1 // pred_region
      %29 = vsyncadd [#allocation7], 0
      %s30 = sshll.u32 %s1, 4
      %s31 = int_to_ptr.hbm [resolvable:$true] %s30
      %s32 = sshll.u32 [#allocation6], 4
      %s33 = int_to_ptr.vmem [resolvable:$true] %s32
      %38 = dma.hbm_to_vmem [thread:$0]  %s31, 1024, %s33, [#allocation7], 64, 64, 4
    $region9: #{tpu_custom_call.1} parent=1 // pred_fallthru
      _
    // Predicated region
    $region10: #{tpu_custom_call.1} parent=1 // pred_check
      _
    $region11: #{tpu_custom_call.1} parent=1 // pred_check_branch
      %40 = sbr.rel (0) target = $region13
    $region12: #{tpu_custom_call.1} parent=1 // pred_region
      _
    $region13: #{tpu_custom_call.1} parent=1 // pred_fallthru
      _
    // Predicated region
    $region14: #{tpu_custom_call.1} parent=1 // pred_check
      _
    $region15: #{tpu_custom_call.1} parent=1 // pred_check_branch
      %42 = sbr.rel (0) target = $region17
    $region16: #{tpu_custom_call.1} parent=1 // pred_region
      %44 = vsyncadd [#allocation7], 0
      %s45 = sshll.u32 %s3, 4
      %s46 = int_to_ptr.hbm [resolvable:$true] %s45
      %s47 = sshll.u32 [#allocation8], 4
      %s48 = int_to_ptr.vmem [resolvable:$true] %s47
      %53 = dma.hbm_to_vmem [thread:$0]  %s46, 1024, %s48, [#allocation7], 64, 64, 4
    $region17: #{tpu_custom_call.1} parent=1 // pred_fallthru
      _
    // Predicated region
    $region18: #{tpu_custom_call.1} parent=1 // pred_check
      _
    $region19: #{tpu_custom_call.1} parent=1 // pred_check_branch
      %55 = sbr.rel (0) target = $region21
    $region20: #{tpu_custom_call.1} parent=1 // pred_region
      _
    $region21: #{tpu_custom_call.1} parent=1 // pred_fallthru
      _
    // Predicated region
    $region22: #{tpu_custom_call.1} parent=1 // pred_check
      _
    $region23: #{tpu_custom_call.1} parent=1 // pred_check_branch
      %57 = sbr.rel (0) target = $region25
    $region24: #{tpu_custom_call.1} parent=1 // pred_region
      %59 = dma.done [#allocation4], 128
    $region25: #{tpu_custom_call.1} parent=1 // pred_fallthru
      _
    // Predicated region
    $region26: #{tpu_custom_call.1} parent=1 // pred_check
      _
    $region27: #{tpu_custom_call.1} parent=1 // pred_check_branch
      %61 = sbr.rel (0) target = $region29
    $region28: #{tpu_custom_call.1} parent=1 // pred_region
      %63 = dma.done [#allocation7], 1024
    $region29: #{tpu_custom_call.1} parent=1 // pred_fallthru
      _
    // Predicated region
    $region30: #{tpu_custom_call.1} parent=1 // pred_check
      _
    $region31: #{tpu_custom_call.1} parent=1 // pred_check_branch
      %65 = sbr.rel (0) target = $region33
    $region32: #{tpu_custom_call.1} parent=1 // pred_region
      %67 = dma.done [#allocation7], 1024
    $region33: #{tpu_custom_call.1} parent=1 // pred_fallthru
      _
    %v68 = vld [vmem:[#allocation3] sm:$0xf]
    %v69 = vld [vmem:[#allocation3 + $0x4] sm:$0xf]
    %v70 = vld [vmem:[#allocation6] sm:$0xf]
    %v71 = vld [vmem:[#allocation6 + $0x4] sm:$0xf]
    %v72 = vld [vmem:[#allocation6 + $0x8] sm:$0xf]
    %v73 = vld [vmem:[#allocation6 + $0xc] sm:$0xf]
    %v74 = vld [vmem:[#allocation6 + $0x10] sm:$0xf]
    %v75 = vld [vmem:[#allocation6 + $0x14] sm:$0xf]
    %v76 = vld [vmem:[#allocation6 + $0x18] sm:$0xf]
    %v77 = vld [vmem:[#allocation6 + $0x1c] sm:$0xf]
    %v78 = vld [vmem:[#allocation6 + $0x20] sm:$0xf]
    %v79 = vld [vmem:[#allocation6 + $0x24] sm:$0xf]
    %v80 = vld [vmem:[#allocation6 + $0x28] sm:$0xf]
    %v81 = vld [vmem:[#allocation6 + $0x2c] sm:$0xf]
    %v82 = vld [vmem:[#allocation6 + $0x30] sm:$0xf]
    %v83 = vld [vmem:[#allocation6 + $0x34] sm:$0xf]
    %v84 = vld [vmem:[#allocation6 + $0x38] sm:$0xf]
    %v85 = vld [vmem:[#allocation6 + $0x3c] sm:$0xf]
    %v86 = vld [vmem:[%s2] sm:$0x1]
    %v88 = vperm.slane %v86, 0
    %v92 = vunpack.c.l.b16 %v68
    %v93 = vunpack.c.l.b16 %v69
    %v94 = vpack.c.b16 %v93, %v92
    %v112 = vunpack.c.l.b16 %v70
    %v113 = vunpack.c.l.b16 %v71
    %v114 = vunpack.c.l.b16 %v72
    %v115 = vunpack.c.l.b16 %v73
    %v116 = vunpack.c.l.b16 %v74
    %v117 = vunpack.c.l.b16 %v75
    %v118 = vunpack.c.l.b16 %v76
    %v119 = vunpack.c.l.b16 %v77
    %v120 = vunpack.c.l.b16 %v78
    %v121 = vunpack.c.l.b16 %v79
    %v122 = vunpack.c.l.b16 %v80
    %v123 = vunpack.c.l.b16 %v81
    %v124 = vunpack.c.l.b16 %v82
    %v125 = vunpack.c.l.b16 %v83
    %v126 = vunpack.c.l.b16 %v84
    %v127 = vunpack.c.l.b16 %v85
    %v128 = vpack.c.b16 %v113, %v112
    %v129 = vpack.c.b16 %v115, %v114
    %v130 = vpack.c.b16 %v117, %v116
    %v131 = vpack.c.b16 %v119, %v118
    %v132 = vpack.c.b16 %v121, %v120
    %v133 = vpack.c.b16 %v123, %v122
    %v134 = vpack.c.b16 %v125, %v124
    %v135 = vpack.c.b16 %v127, %v126
    %144 = vmatpush.bf16.msra.mxu0 %v135
    %145 = vmatpush.bf16.msra.mxu0 %v134
    %146 = vmatpush.bf16.msra.mxu0 %v133
    %147 = vmatpush.bf16.msra.mxu0 %v132
    %148 = vmatpush.bf16.msra.mxu0 %v131
    %149 = vmatpush.bf16.msra.mxu0 %v130
    %150 = vmatpush.bf16.msra.mxu0 %v129
    %151 = vmatpush.bf16.msra.mxu0 %v128
    %152 = vmatmul.bf16.gmra.mxu0 %v94
    %v153 = vpop.f32.mrf.mxu0
    %v154 = vadd.f32 %v88, %v153
    %v155 = vpop.f32.mrf.mxu0
    %v156 = vadd.f32 %v88, %v155
    %157 = vdwg.mxu0
    %v158 = vmax.f32 %v154, 0.0
    %v159 = vmax.f32 %v156, 0.0
    %v160 = vpack.c.bf16 %v159, %v158
    %v161 = vld [vmem:[#allocation8] sm:$0xf]
    %v162 = vld [vmem:[#allocation8 + $0x4] sm:$0xf]
    %v163 = vld [vmem:[#allocation8 + $0x8] sm:$0xf]
    %v164 = vld [vmem:[#allocation8 + $0xc] sm:$0xf]
    %v165 = vld [vmem:[#allocation8 + $0x10] sm:$0xf]
    %v166 = vld [vmem:[#allocation8 + $0x14] sm:$0xf]
    %v167 = vld [vmem:[#allocation8 + $0x18] sm:$0xf]
    %v168 = vld [vmem:[#allocation8 + $0x1c] sm:$0xf]
    %v169 = vld [vmem:[#allocation8 + $0x20] sm:$0xf]
    %v170 = vld [vmem:[#allocation8 + $0x24] sm:$0xf]
    %v171 = vld [vmem:[#allocation8 + $0x28] sm:$0xf]
    %v172 = vld [vmem:[#allocation8 + $0x2c] sm:$0xf]
    %v173 = vld [vmem:[#allocation8 + $0x30] sm:$0xf]
    %v174 = vld [vmem:[#allocation8 + $0x34] sm:$0xf]
    %v175 = vld [vmem:[#allocation8 + $0x38] sm:$0xf]
    %v176 = vld [vmem:[#allocation8 + $0x3c] sm:$0xf]
    %v193 = vunpack.c.l.b16 %v161
    %v194 = vunpack.c.l.b16 %v162
    %v195 = vunpack.c.l.b16 %v163
    %v196 = vunpack.c.l.b16 %v164
    %v197 = vunpack.c.l.b16 %v165
    %v198 = vunpack.c.l.b16 %v166
    %v199 = vunpack.c.l.b16 %v167
    %v200 = vunpack.c.l.b16 %v168
    %v201 = vunpack.c.l.b16 %v169
    %v202 = vunpack.c.l.b16 %v170
    %v203 = vunpack.c.l.b16 %v171
    %v204 = vunpack.c.l.b16 %v172
    %v205 = vunpack.c.l.b16 %v173
    %v206 = vunpack.c.l.b16 %v174
    %v207 = vunpack.c.l.b16 %v175
    %v208 = vunpack.c.l.b16 %v176
    %v209 = vpack.c.b16 %v194, %v193
    %v210 = vpack.c.b16 %v196, %v195
    %v211 = vpack.c.b16 %v198, %v197
    %v212 = vpack.c.b16 %v200, %v199
    %v213 = vpack.c.b16 %v202, %v201
    %v214 = vpack.c.b16 %v204, %v203
    %v215 = vpack.c.b16 %v206, %v205
    %v216 = vpack.c.b16 %v208, %v207
    %225 = vmatpush.bf16.msra.mxu0 %v216
    %226 = vmatpush.bf16.msra.mxu0 %v215
    %227 = vmatpush.bf16.msra.mxu0 %v214
    %228 = vmatpush.bf16.msra.mxu0 %v213
    %229 = vmatpush.bf16.msra.mxu0 %v212
    %230 = vmatpush.bf16.msra.mxu0 %v211
    %231 = vmatpush.bf16.msra.mxu0 %v210
    %232 = vmatpush.bf16.msra.mxu0 %v209
    %233 = vmatmul.bf16.gmra.mxu0 %v160
    %v234 = vpop.f32.mrf.mxu0
    %v235 = vadd.f32 0.0, %v234
    %v236 = vpop.f32.mrf.mxu0
    %v237 = vadd.f32 0.0, %v236
    %238 = vdwg.mxu0
    %p239 = scmp.eq.s32.totalorder 0, 0
    // Predicated region
    $region34: #{tpu_custom_call.1} parent=1 // pred_check
      %p240 = pneg %p239
    $region35: #{tpu_custom_call.1} parent=1 // pred_check_branch
      %242 = sbr.rel (%p240) target = $region37
    $region36: #{tpu_custom_call.1} parent=1 // pred_region
      %243 = vst [vmem:[#allocation2] sm:$0xff] %v235
      %244 = vst [vmem:[#allocation2 + $0x8] sm:$0xff] %v237
    $region37: #{tpu_custom_call.1} parent=1 // pred_fallthru
      _
    %p245 = scmp.gt.s32.totalorder 0, 0
    // Predicated region
    $region38: #{tpu_custom_call.1} parent=1 // pred_check
      %p246 = pneg %p245
    $region39: #{tpu_custom_call.1} parent=1 // pred_check_branch
      %248 = sbr.rel (%p246) target = $region41
    $region40: #{tpu_custom_call.1} parent=1 // pred_region
      %v249 = vld [vmem:[#allocation2] sm:$0xff]
      %v250 = vld [vmem:[#allocation2 + $0x8] sm:$0xff]
      %v251 = vadd.f32 %v249, %v235
      %v252 = vadd.f32 %v250, %v237
      %253 = vst [vmem:[#allocation2] sm:$0xff] %v251
      %254 = vst [vmem:[#allocation2 + $0x8] sm:$0xff] %v252
    $region41: #{tpu_custom_call.1} parent=1 // pred_fallthru
      _
    // Predicated region
    $region42: #{tpu_custom_call.1} parent=1 // pred_check
      %p255 = pneg %p239
    $region43: #{tpu_custom_call.1} parent=1 // pred_check_branch
      %257 = sbr.rel (%p255) target = $region45
    $region44: #{tpu_custom_call.1} parent=1 // pred_region
      %v258 = vld [vmem:[#allocation2] sm:$0xff]
      %v259 = vld [vmem:[#allocation2 + $0x8] sm:$0xff]
      %v260 = vld [vmem:[%s4] sm:$0x1]
      %v262 = vperm.slane %v260, 0
      %v264 = vadd.f32 %v258, %v262
      %v265 = vadd.f32 %v259, %v262
      %266 = vst [vmem:[#allocation9] sm:$0xff] %v264
      %267 = vst [vmem:[#allocation9 + $0x8] sm:$0xff] %v265
    $region45: #{tpu_custom_call.1} parent=1 // pred_fallthru
      _
    // Predicated region
    $region46: #{tpu_custom_call.1} parent=1 // pred_check
      _
    $region47: #{tpu_custom_call.1} parent=1 // pred_check_branch
      %269 = sbr.rel (0) target = $region49
    $region48: #{tpu_custom_call.1} parent=1 // pred_region
      %271 = vsyncadd [#allocation5], 0
      %s272 = sshll.u32 [#allocation9], 4
      %s273 = int_to_ptr.vmem [resolvable:$true] %s272
      %s274 = sshll.u32 %s5, 4
      %s275 = int_to_ptr.hbm [resolvable:$true] %s274
      %280 = dma.vmem_to_hbm [thread:$0]  %s273, 256, %s275, [#allocation5], 128, 128, 8
    $region49: #{tpu_custom_call.1} parent=1 // pred_fallthru
      _
    // Predicated region
    $region50: #{tpu_custom_call.1} parent=1 // pred_check
      _
    $region51: #{tpu_custom_call.1} parent=1 // pred_check_branch
      %282 = sbr.rel (0) target = $region53
    $region52: #{tpu_custom_call.1} parent=1 // pred_region
      %284 = dma.done [#allocation5], 256
    $region53: #{tpu_custom_call.1} parent=1 // pred_fallthru
      _
    %285 = vsyncpa [#allocation4], 1
    %286 = vsyncpa [#allocation7], 1
    %287 = vsyncpa [#allocation5], 1

</llo_original>
